<compile_context>
chip_gen: v5e
topology: v5e:2x2
jax: 0.10.0
libtpu: 0.0.40
codegen_flags: <defaults>
</compile_context>

<pallas_src>
import functools

import jax
import jax.numpy as jnp
from jax import lax
from jax.experimental import pallas as pl
from jax.experimental.pallas import tpu as pltpu

BN_EPS = 1e-5


# ------------------------------ Pallas kernel -------------------------------

def _down_kernel(a_ref, b1_ref, b2_ref, w_ref, shift_ref, o_ref,
                 pool_ref, patch_ref, *, th, wp, cin, cout):
    """Fused AvgPool2d(2) + Conv3x3(pad=1) + folded-BN + ReLU for one (n, row-tile) step.

    a_ref     : (th, 2, Wp+2, 2*Cin)  raw rows for pooled-padded rows [i*th, i*th+th)
    b1_ref    : (1,  2, Wp+2, 2*Cin)  halo: pooled-padded row i*th+th
    b2_ref    : (1,  2, Wp+2, 2*Cin)  halo: pooled-padded row i*th+th+1
    w_ref     : (9*Cin, Cout)         conv taps (kh,kw,cin-major) with BN scale folded
    shift_ref : (1, Cout)             folded conv-bias / BN shift (f32)
    o_ref     : (th*Wp, Cout)         flat output rows (lane/store dense layout)
    pool_ref  : VMEM (th+2, Wp+2, Cin) f32       pooled + zero-padded tile
    patch_ref : VMEM (th*Wp, 9*Cin)   matmul dtype  fused im2col patch matrix
    """

    def pool2x2(v):
        # v: (rows, 2, Wp+2, 2*Cin) -> (rows, Wp+2, Cin); 2x2 mean.
        s = v[:, 0, :, :] + v[:, 1, :, :]               # sum over the row pair
        return 0.25 * (s[:, :, :cin] + s[:, :, cin:])   # sum over the column pair

    # Build the pooled (already zero-padded) tile in VMEM scratch.
    pool_ref[0:th, :, :] = pool2x2(a_ref[...])
    pool_ref[th:th + 1, :, :] = pool2x2(b1_ref[...])
    pool_ref[th + 1:th + 2, :, :] = pool2x2(b2_ref[...])

    # Fused im2col: write the 9 shifted taps once into the patch matrix (columns ordered
    # (kh*3+kw)*Cin + c, matching the weight layout), then do ONE MXU matmul with
    # K = 9*Cin.  No accumulator is carried across taps.
    for kh in range(3):
        for kw in range(3):
            t = kh * 3 + kw
            patch_ref[:, t * cin:(t + 1) * cin] = (
                pool_ref[kh:kh + th, kw:kw + wp, :]
                .reshape(th * wp, cin).astype(patch_ref.dtype))

    acc = jnp.dot(patch_ref[...], w_ref[...],
                  preferred_element_type=jnp.float32)          # (th*Wp, Cout) f32

    # Folded BN shift + ReLU epilogue; direct lane-dense store (no reshape).
    o_ref[...] = jnp.maximum(acc + shift_ref[...], 0.0).astype(o_ref.dtype)


# ------------------------------ tiling helpers --------------------------------

def _round_up(v, m):
    return ((v + m - 1) // m) * m


def _default_vmem_limit():
    """75% of detected VMEM capacity, capped at 96 MiB (v7x-safe fallback 48 MiB)."""
    cap = None
    try:
        info = pltpu.get_tpu_info()
        cap = getattr(info, "vmem_capacity_bytes", None)
    except Exception:
        cap = None
    if not cap:
        return 48 * 1024 * 1024
    return min(int(0.75 * cap), 96 * 1024 * 1024)


def _pick_row_tile(n, hp, wp, cin, cout, target_rows, vmem_limit, mm_itemsize):
    """Pick a divisor of hp: fits VMEM (padded-tiling model), keeps the output block
    (8,128)-legal, gives >=4 grid steps when possible, and targets ~target_rows output
    pixels per step."""
    budget = int(0.7 * vmem_limit)
    lane_in = _round_up(2 * cin, 128)
    sub_in = _round_up(wp + 2, 8)
    lane_pool = _round_up(cin, 128)
    lane_k = _round_up(9 * cin, 128)
    lane_out = _round_up(cout, 128)

    def vmem_bytes(th):
        rows8 = _round_up(th * wp, 8)
        in_blk = th * 2 * sub_in * lane_in * 4
        halo_blk = 2 * (2 * sub_in * lane_in * 4)
        out_blk = rows8 * lane_out * 4
        pool = (th + 2) * sub_in * lane_pool * 4
        patch = rows8 * lane_k * mm_itemsize
        acc_tmp = rows8 * lane_out * 4                      # matmul result before store
        weights = _round_up(9 * cin, 8) * lane_out * mm_itemsize + lane_out * 4
        # pipelined blocks are double buffered
        return 2 * (in_blk + halo_blk + out_blk + weights) + pool + patch + acc_tmp

    divs = [d for d in range(1, hp + 1) if hp % d == 0]
    ok_align = lambda d: (d * wp) % 8 == 0 or d == hp       # output block legality
    fits = lambda d: vmem_bytes(d) <= budget
    steps = lambda d: n * (hp // d)

    good = [d for d in divs if ok_align(d) and fits(d)]
    if good:
        pref = ([d for d in good if steps(d) >= 4]
                or [d for d in good if steps(d) >= 2]
                or good)
        return min(pref, key=lambda d: abs(d * wp - target_rows))
    aligned = [d for d in divs if ok_align(d)]              # never empty (contains hp)
    return min(aligned, key=vmem_bytes)


# ------------------------------ wrapper --------------------------------------

def down_forward(params, x_nchw, *, target_rows=16384, vmem_limit=None,
                 matmul_dtype=jnp.bfloat16):
    """down(in_ch, out_ch): AvgPool2d(2) -> Conv2d(3x3, pad=1) -> BN(eval) -> ReLU.

    x_nchw: (N, Cin, H, W) float32 (PyTorch layout). Returns (N, Cout, H//2, W//2).
    """
    w, b, gamma, beta, mean, var = params
    cout, cin, kh_, kw_ = w.shape
    assert (kh_, kw_) == (3, 3)

    N, Cin, H, W = x_nchw.shape
    assert Cin == cin
    He, We = (H // 2) * 2, (W // 2) * 2          # AvgPool2d(2) floors odd sizes
    Hp, Wp = He // 2, We // 2
    assert Hp >= 1 and Wp >= 1

    if vmem_limit is None:
        vmem_limit = _default_vmem_limit()

    # NCHW -> NHWC, crop to even spatial, zero-pad by 2 (== pad 1 in pooled space == the
    # conv's padding), then a *free* reshape that pairs up pooling rows/columns:
    #   (N, He+4, We+4, Cin) -> (N, Hp+2, 2, Wp+2, 2*Cin)
    x = jnp.transpose(x_nchw[:, :, :He, :We], (0, 2, 3, 1)).astype(jnp.float32)
    xp = jnp.pad(x, ((0, 0), (2, 2), (2, 2), (0, 0)))
    xr = xp.reshape(N, Hp + 2, 2, Wp + 2, 2 * cin)

    # Fold BN (inference) + conv bias:  y = ReLU(pool(x) *conv* (w*scale) + shift)
    # Weight layout matches the im2col columns: row index = (kh*3+kw)*Cin + c.
    scale = gamma * lax.rsqrt(var + BN_EPS)
    shift = ((b - mean) * scale + beta).reshape(1, cout).astype(jnp.float32)
    w9 = (jnp.transpose(w, (2, 3, 1, 0)).reshape(9 * cin, cout)
          * scale.reshape(1, cout)).astype(matmul_dtype)

    mm_itemsize = jnp.dtype(matmul_dtype).itemsize
    th = _pick_row_tile(N, Hp, Wp, cin, cout, target_rows, vmem_limit, mm_itemsize)
    grid = (N, Hp // th)

    kernel = functools.partial(_down_kernel, th=th, wp=Wp, cin=cin, cout=cout)

    out = pl.pallas_call(
        kernel,
        # Flat (N, Hp*Wp, Cout) output: lane/store-dense blocks, no in-kernel reshape;
        # the reshape back to (N, Hp, Wp, Cout) below is a free HBM reshape.
        out_shape=jax.ShapeDtypeStruct((N, Hp * Wp, cout), jnp.float32),
        grid=grid,
        in_specs=[
            # main block: pooled-padded rows [i*th, i*th+th)
            pl.BlockSpec((None, th, 2, Wp + 2, 2 * cin),
                         lambda n, i: (n, i, 0, 0, 0)),
            # 2-row conv halo, as two 1-row views of the same array (no XLA copies)
            pl.BlockSpec((None, 1, 2, Wp + 2, 2 * cin),
                         lambda n, i: (n, i * th + th, 0, 0, 0)),
            pl.BlockSpec((None, 1, 2, Wp + 2, 2 * cin),
                         lambda n, i: (n, i * th + th + 1, 0, 0, 0)),
            pl.BlockSpec((9 * cin, cout), lambda n, i: (0, 0)),   # resident bf16 weights
            pl.BlockSpec((1, cout), lambda n, i: (0, 0)),         # folded shift
        ],
        out_specs=pl.BlockSpec((None, th * Wp, cout), lambda n, i: (n, i, 0)),
        scratch_shapes=[
            pltpu.VMEM((th + 2, Wp + 2, cin), jnp.float32),       # pooled tile
            pltpu.VMEM((th * Wp, 9 * cin), matmul_dtype),         # im2col patch matrix
        ],
        compiler_params=pltpu.CompilerParams(
            dimension_semantics=("parallel", "parallel"),
            vmem_limit_bytes=vmem_limit),
    )(xr, xr, xr, w9, shift)

    out = out.reshape(N, Hp, Wp, cout)
    return jnp.transpose(out, (0, 3, 1, 2))     # NHWC -> NCHW


# ------------------------------ reference + test -----------------------------

def init_params(key, in_ch, out_ch):
    kw_, kb, kg, kbe, km, kv = jax.random.split(key, 6)
    w = 0.2 * jax.random.normal(kw_, (out_ch, in_ch, 3, 3), jnp.float32)   # OIHW
    b = 0.1 * jax.random.normal(kb, (out_ch,), jnp.float32)
    gamma = 1.0 + 0.1 * jax.random.normal(kg, (out_ch,), jnp.float32)
    beta = 0.1 * jax.random.normal(kbe, (out_ch,), jnp.float32)
    mean = 0.1 * jax.random.normal(km, (out_ch,), jnp.float32)
    var = jax.random.uniform(kv, (out_ch,), jnp.float32, minval=0.5, maxval=1.5)
    return (w, b, gamma, beta, mean, var)


def reference_forward(params, x_nchw):
    # Plain-JAX reference (NCHW), eval-mode BatchNorm.
    w, b, gamma, beta, mean, var = params
    N, C, H, W = x_nchw.shape
    He, We = (H // 2) * 2, (W // 2) * 2
    xe = x_nchw[:, :, :He, :We]
    pooled = xe.reshape(N, C, He // 2, 2, We // 2, 2).mean(axis=(3, 5))
    y = lax.conv_general_dilated(pooled, w, (1, 1), ((1, 1), (1, 1)),
                                 dimension_numbers=("NCHW", "OIHW", "NCHW"),
                                 precision=lax.Precision.HIGHEST)
    y = y + b[None, :, None, None]
    y = (y - mean[None, :, None, None]) * lax.rsqrt(var[None, :, None, None] + BN_EPS)
    y = y * gamma[None, :, None, None] + beta[None, :, None, None]
    return jnp.maximum(y, 0.0)


if __name__ == "__main__":
    root = jax.random.PRNGKey(0)
    pkey, xkey, pkey2, xkey2 = jax.random.split(root, 4)

    # Required small config: (2, 4, 16, 16) -> (2, 8, 8, 8)
    in_ch, out_ch = 4, 8
    params = init_params(pkey, in_ch, out_ch)
    x = jax.random.normal(xkey, (2, in_ch, 16, 16), dtype=jnp.float32)

    fwd = jax.jit(down_forward)
    out = jax.block_until_ready(fwd(params, x))
    assert out.shape == (2, out_ch, 8, 8), out.shape

    ref = jax.block_until_ready(reference_forward(params, x))
    # bf16 matmul operands (f32 MXU accumulation): 2e-2 tolerance has ample margin.
    if not jnp.allclose(out, ref, atol=2e-2, rtol=2e-2):
        raise AssertionError(
            f"mismatch vs reference (cfg1), max abs err={float(jnp.max(jnp.abs(out - ref)))}")

    # Second, larger / well-aligned config: (2, 8, 32, 32) -> (2, 16, 16, 16)
    in_ch2, out_ch2 = 8, 16
    params2 = init_params(pkey2, in_ch2, out_ch2)
    x2 = jax.random.normal(xkey2, (2, in_ch2, 32, 32), dtype=jnp.float32)
    out2 = jax.block_until_ready(jax.jit(down_forward)(params2, x2))
    assert out2.shape == (2, out_ch2, 16, 16), out2.shape
    ref2 = jax.block_until_ready(reference_forward(params2, x2))
    if not jnp.allclose(out2, ref2, atol=2e-2, rtol=2e-2):
        raise AssertionError(
            f"mismatch vs reference (cfg2), max abs err={float(jnp.max(jnp.abs(out2 - ref2)))}")

    print("KERNEL_OK")
</pallas_src>

<mosaic_0001>
module attributes {stable_mosaic.version = 11 : i64} {
  func.func @_down_kernel(%arg0: i32, %arg1: i32, %arg2: memref<1x4x2x10x8xf32, #tpu.memory_space<vmem>>, %arg3: memref<1x1x2x10x8xf32, #tpu.memory_space<vmem>>, %arg4: memref<1x1x2x10x8xf32, #tpu.memory_space<vmem>>, %arg5: memref<36x8xbf16, #tpu.memory_space<vmem>>, %arg6: memref<1x8xf32, #tpu.memory_space<vmem>>, %arg7: memref<1x32x8xf32, #tpu.memory_space<vmem>>, %arg8: memref<6x10x4xf32, #tpu.memory_space<vmem>>, %arg9: memref<32x36xbf16, #tpu.memory_space<vmem>>) attributes {dimension_semantics = [#tpu.dimension_semantics<parallel>, #tpu.dimension_semantics<parallel>], iteration_bounds = array<i64: 2, 2>, scalar_prefetch = 0 : i64, scratch_operands = 2 : i64, tpu.core_type = #tpu.core_type<tc>, window_params = [{transform_indices = @transform_0, window_bounds = array<i64: 1, 4, 2, 10, 8>}, {transform_indices = @transform_1, window_bounds = array<i64: 1, 1, 2, 10, 8>}, {transform_indices = @transform_2, window_bounds = array<i64: 1, 1, 2, 10, 8>}, {pipeline_mode = #tpu.pipeline_mode<synchronous>, transform_indices = @transform_3, window_bounds = array<i64: 36, 8>}, {pipeline_mode = #tpu.pipeline_mode<synchronous>, transform_indices = @transform_4, window_bounds = array<i64: 1, 8>}, {transform_indices = @transform_5, window_bounds = array<i64: 1, 32, 8>}]} {
    %c0 = arith.constant 0 : index
    %c0_0 = arith.constant 0 : index
    %c0_1 = arith.constant 0 : index
    %c0_2 = arith.constant 0 : index
    %c0_3 = arith.constant 0 : index
    %0 = vector.load %arg2[%c0, %c0_0, %c0_1, %c0_2, %c0_3] : memref<1x4x2x10x8xf32, #tpu.memory_space<vmem>>, vector<1x4x2x10x8xf32>
    %1 = vector.shape_cast %0 : vector<1x4x2x10x8xf32> to vector<4x2x10x8xf32>
    %2 = vector.extract_strided_slice %1 {offsets = [0, 0, 0, 0], sizes = [4, 1, 10, 8], strides = [1, 1, 1, 1]} : vector<4x2x10x8xf32> to vector<4x1x10x8xf32>
    %3 = vector.shape_cast %2 : vector<4x1x10x8xf32> to vector<4x10x8xf32>
    %4 = vector.extract_strided_slice %1 {offsets = [0, 1, 0, 0], sizes = [4, 1, 10, 8], strides = [1, 1, 1, 1]} : vector<4x2x10x8xf32> to vector<4x1x10x8xf32>
    %5 = vector.shape_cast %4 : vector<4x1x10x8xf32> to vector<4x10x8xf32>
    %6 = arith.addf %3, %5 : vector<4x10x8xf32>
    %7 = vector.extract_strided_slice %6 {offsets = [0, 0, 0], sizes = [4, 10, 4], strides = [1, 1, 1]} : vector<4x10x8xf32> to vector<4x10x4xf32>
    %8 = vector.extract_strided_slice %6 {offsets = [0, 0, 4], sizes = [4, 10, 4], strides = [1, 1, 1]} : vector<4x10x8xf32> to vector<4x10x4xf32>
    %9 = arith.addf %7, %8 : vector<4x10x4xf32>
    %cst = arith.constant 2.500000e-01 : f32
    %10 = vector.broadcast %cst : f32 to vector<4x10x4xf32>
    %11 = arith.mulf %10, %9 : vector<4x10x4xf32>
    %c0_4 = arith.constant 0 : index
    %c0_5 = arith.constant 0 : index
    %c0_6 = arith.constant 0 : index
    %12 = vector.load %arg8[%c0_4, %c0_5, %c0_6] : memref<6x10x4xf32, #tpu.memory_space<vmem>>, vector<4x10x4xf32>
    tpu.vector_store %arg8[%c0_4, %c0_5, %c0_6], %11 {strides = array<i32>} : memref<6x10x4xf32, #tpu.memory_space<vmem>>, vector<4x10x4xf32>,
    %c0_7 = arith.constant 0 : index
    %c0_8 = arith.constant 0 : index
    %c0_9 = arith.constant 0 : index
    %c0_10 = arith.constant 0 : index
    %c0_11 = arith.constant 0 : index
    %13 = vector.load %arg3[%c0_7, %c0_8, %c0_9, %c0_10, %c0_11] : memref<1x1x2x10x8xf32, #tpu.memory_space<vmem>>, vector<1x1x2x10x8xf32>
    %14 = vector.shape_cast %13 : vector<1x1x2x10x8xf32> to vector<1x2x10x8xf32>
    %15 = vector.extract_strided_slice %14 {offsets = [0, 0, 0, 0], sizes = [1, 1, 10, 8], strides = [1, 1, 1, 1]} : vector<1x2x10x8xf32> to vector<1x1x10x8xf32>
    %16 = vector.shape_cast %15 : vector<1x1x10x8xf32> to vector<1x10x8xf32>
    %17 = vector.extract_strided_slice %14 {offsets = [0, 1, 0, 0], sizes = [1, 1, 10, 8], strides = [1, 1, 1, 1]} : vector<1x2x10x8xf32> to vector<1x1x10x8xf32>
    %18 = vector.shape_cast %17 : vector<1x1x10x8xf32> to vector<1x10x8xf32>
    %19 = arith.addf %16, %18 : vector<1x10x8xf32>
    %20 = vector.extract_strided_slice %19 {offsets = [0, 0, 0], sizes = [1, 10, 4], strides = [1, 1, 1]} : vector<1x10x8xf32> to vector<1x10x4xf32>
    %21 = vector.extract_strided_slice %19 {offsets = [0, 0, 4], sizes = [1, 10, 4], strides = [1, 1, 1]} : vector<1x10x8xf32> to vector<1x10x4xf32>
    %22 = arith.addf %20, %21 : vector<1x10x4xf32>
    %cst_12 = arith.constant 2.500000e-01 : f32
    %23 = vector.broadcast %cst_12 : f32 to vector<1x10x4xf32>
    %24 = arith.mulf %23, %22 : vector<1x10x4xf32>
    %c4 = arith.constant 4 : index
    %c0_13 = arith.constant 0 : index
    %c0_14 = arith.constant 0 : index
    %25 = vector.load %arg8[%c4, %c0_13, %c0_14] : memref<6x10x4xf32, #tpu.memory_space<vmem>>, vector<1x10x4xf32>
    tpu.vector_store %arg8[%c4, %c0_13, %c0_14], %24 {strides = array<i32>} : memref<6x10x4xf32, #tpu.memory_space<vmem>>, vector<1x10x4xf32>,
    %c0_15 = arith.constant 0 : index
    %c0_16 = arith.constant 0 : index
    %c0_17 = arith.constant 0 : index
    %c0_18 = arith.constant 0 : index
    %c0_19 = arith.constant 0 : index
    %26 = vector.load %arg4[%c0_15, %c0_16, %c0_17, %c0_18, %c0_19] : memref<1x1x2x10x8xf32, #tpu.memory_space<vmem>>, vector<1x1x2x10x8xf32>
    %27 = vector.shape_cast %26 : vector<1x1x2x10x8xf32> to vector<1x2x10x8xf32>
    %28 = vector.extract_strided_slice %27 {offsets = [0, 0, 0, 0], sizes = [1, 1, 10, 8], strides = [1, 1, 1, 1]} : vector<1x2x10x8xf32> to vector<1x1x10x8xf32>
    %29 = vector.shape_cast %28 : vector<1x1x10x8xf32> to vector<1x10x8xf32>
    %30 = vector.extract_strided_slice %27 {offsets = [0, 1, 0, 0], sizes = [1, 1, 10, 8], strides = [1, 1, 1, 1]} : vector<1x2x10x8xf32> to vector<1x1x10x8xf32>
    %31 = vector.shape_cast %30 : vector<1x1x10x8xf32> to vector<1x10x8xf32>
    %32 = arith.addf %29, %31 : vector<1x10x8xf32>
    %33 = vector.extract_strided_slice %32 {offsets = [0, 0, 0], sizes = [1, 10, 4], strides = [1, 1, 1]} : vector<1x10x8xf32> to vector<1x10x4xf32>
    %34 = vector.extract_strided_slice %32 {offsets = [0, 0, 4], sizes = [1, 10, 4], strides = [1, 1, 1]} : vector<1x10x8xf32> to vector<1x10x4xf32>
    %35 = arith.addf %33, %34 : vector<1x10x4xf32>
    %cst_20 = arith.constant 2.500000e-01 : f32
    %36 = vector.broadcast %cst_20 : f32 to vector<1x10x4xf32>
    %37 = arith.mulf %36, %35 : vector<1x10x4xf32>
    %c5 = arith.constant 5 : index
    %c0_21 = arith.constant 0 : index
    %c0_22 = arith.constant 0 : index
    %38 = vector.load %arg8[%c5, %c0_21, %c0_22] : memref<6x10x4xf32, #tpu.memory_space<vmem>>, vector<1x10x4xf32>
    tpu.vector_store %arg8[%c5, %c0_21, %c0_22], %37 {strides = array<i32>} : memref<6x10x4xf32, #tpu.memory_space<vmem>>, vector<1x10x4xf32>,
    %c0_23 = arith.constant 0 : index
    %c0_24 = arith.constant 0 : index
    %c0_25 = arith.constant 0 : index
    %39 = vector.load %arg8[%c0_23, %c0_24, %c0_25] : memref<6x10x4xf32, #tpu.memory_space<vmem>>, vector<4x8x4xf32>
    %40 = vector.shape_cast %39 : vector<4x8x4xf32> to vector<32x4xf32>
    %41 = arith.truncf %40 : vector<32x4xf32> to vector<32x4xbf16>
    %c0_26 = arith.constant 0 : index
    %c0_27 = arith.constant 0 : index
    %42 = vector.load %arg9[%c0_26, %c0_27] : memref<32x36xbf16, #tpu.memory_space<vmem>>, vector<32x4xbf16>
    tpu.vector_store %arg9[%c0_26, %c0_27], %41 {strides = array<i32>} : memref<32x36xbf16, #tpu.memory_space<vmem>>, vector<32x4xbf16>,
    %c0_28 = arith.constant 0 : index
    %c1 = arith.constant 1 : index
    %c0_29 = arith.constant 0 : index
    %43 = vector.load %arg8[%c0_28, %c1, %c0_29] : memref<6x10x4xf32, #tpu.memory_space<vmem>>, vector<4x8x4xf32>
    %44 = vector.shape_cast %43 : vector<4x8x4xf32> to vector<32x4xf32>
    %45 = arith.truncf %44 : vector<32x4xf32> to vector<32x4xbf16>
    %c0_30 = arith.constant 0 : index
    %c4_31 = arith.constant 4 : index
    %46 = vector.load %arg9[%c0_30, %c4_31] : memref<32x36xbf16, #tpu.memory_space<vmem>>, vector<32x4xbf16>
    tpu.vector_store %arg9[%c0_30, %c4_31], %45 {strides = array<i32>} : memref<32x36xbf16, #tpu.memory_space<vmem>>, vector<32x4xbf16>,
    %c0_32 = arith.constant 0 : index
    %c2 = arith.constant 2 : index
    %c0_33 = arith.constant 0 : index
    %47 = vector.load %arg8[%c0_32, %c2, %c0_33] : memref<6x10x4xf32, #tpu.memory_space<vmem>>, vector<4x8x4xf32>
    %48 = vector.shape_cast %47 : vector<4x8x4xf32> to vector<32x4xf32>
    %49 = arith.truncf %48 : vector<32x4xf32> to vector<32x4xbf16>
    %c0_34 = arith.constant 0 : index
    %c8 = arith.constant 8 : index
    %50 = vector.load %arg9[%c0_34, %c8] : memref<32x36xbf16, #tpu.memory_space<vmem>>, vector<32x4xbf16>
    tpu.vector_store %arg9[%c0_34, %c8], %49 {strides = array<i32>} : memref<32x36xbf16, #tpu.memory_space<vmem>>, vector<32x4xbf16>,
    %c1_35 = arith.constant 1 : index
    %c0_36 = arith.constant 0 : index
    %c0_37 = arith.constant 0 : index
    %51 = vector.load %arg8[%c1_35, %c0_36, %c0_37] : memref<6x10x4xf32, #tpu.memory_space<vmem>>, vector<4x8x4xf32>
    %52 = vector.shape_cast %51 : vector<4x8x4xf32> to vector<32x4xf32>
    %53 = arith.truncf %52 : vector<32x4xf32> to vector<32x4xbf16>
    %c0_38 = arith.constant 0 : index
    %c12 = arith.constant 12 : index
    %54 = vector.load %arg9[%c0_38, %c12] : memref<32x36xbf16, #tpu.memory_space<vmem>>, vector<32x4xbf16>
    tpu.vector_store %arg9[%c0_38, %c12], %53 {strides = array<i32>} : memref<32x36xbf16, #tpu.memory_space<vmem>>, vector<32x4xbf16>,
    %c1_39 = arith.constant 1 : index
    %c1_40 = arith.constant 1 : index
    %c0_41 = arith.constant 0 : index
    %55 = vector.load %arg8[%c1_39, %c1_40, %c0_41] : memref<6x10x4xf32, #tpu.memory_space<vmem>>, vector<4x8x4xf32>
    %56 = vector.shape_cast %55 : vector<4x8x4xf32> to vector<32x4xf32>
    %57 = arith.truncf %56 : vector<32x4xf32> to vector<32x4xbf16>
    %c0_42 = arith.constant 0 : index
    %c16 = arith.constant 16 : index
    %58 = vector.load %arg9[%c0_42, %c16] : memref<32x36xbf16, #tpu.memory_space<vmem>>, vector<32x4xbf16>
    tpu.vector_store %arg9[%c0_42, %c16], %57 {strides = array<i32>} : memref<32x36xbf16, #tpu.memory_space<vmem>>, vector<32x4xbf16>,
    %c1_43 = arith.constant 1 : index
    %c2_44 = arith.constant 2 : index
    %c0_45 = arith.constant 0 : index
    %59 = vector.load %arg8[%c1_43, %c2_44, %c0_45] : memref<6x10x4xf32, #tpu.memory_space<vmem>>, vector<4x8x4xf32>
    %60 = vector.shape_cast %59 : vector<4x8x4xf32> to vector<32x4xf32>
    %61 = arith.truncf %60 : vector<32x4xf32> to vector<32x4xbf16>
    %c0_46 = arith.constant 0 : index
    %c20 = arith.constant 20 : index
    %62 = vector.load %arg9[%c0_46, %c20] : memref<32x36xbf16, #tpu.memory_space<vmem>>, vector<32x4xbf16>
    tpu.vector_store %arg9[%c0_46, %c20], %61 {strides = array<i32>} : memref<32x36xbf16, #tpu.memory_space<vmem>>, vector<32x4xbf16>,
    %c2_47 = arith.constant 2 : index
    %c0_48 = arith.constant 0 : index
    %c0_49 = arith.constant 0 : index
    %63 = vector.load %arg8[%c2_47, %c0_48, %c0_49] : memref<6x10x4xf32, #tpu.memory_space<vmem>>, vector<4x8x4xf32>
    %64 = vector.shape_cast %63 : vector<4x8x4xf32> to vector<32x4xf32>
    %65 = arith.truncf %64 : vector<32x4xf32> to vector<32x4xbf16>
    %c0_50 = arith.constant 0 : index
    %c24 = arith.constant 24 : index
    %66 = vector.load %arg9[%c0_50, %c24] : memref<32x36xbf16, #tpu.memory_space<vmem>>, vector<32x4xbf16>
    tpu.vector_store %arg9[%c0_50, %c24], %65 {strides = array<i32>} : memref<32x36xbf16, #tpu.memory_space<vmem>>, vector<32x4xbf16>,
    %c2_51 = arith.constant 2 : index
    %c1_52 = arith.constant 1 : index
    %c0_53 = arith.constant 0 : index
    %67 = vector.load %arg8[%c2_51, %c1_52, %c0_53] : memref<6x10x4xf32, #tpu.memory_space<vmem>>, vector<4x8x4xf32>
    %68 = vector.shape_cast %67 : vector<4x8x4xf32> to vector<32x4xf32>
    %69 = arith.truncf %68 : vector<32x4xf32> to vector<32x4xbf16>
    %c0_54 = arith.constant 0 : index
    %c28 = arith.constant 28 : index
    %70 = vector.load %arg9[%c0_54, %c28] : memref<32x36xbf16, #tpu.memory_space<vmem>>, vector<32x4xbf16>
    tpu.vector_store %arg9[%c0_54, %c28], %69 {strides = array<i32>} : memref<32x36xbf16, #tpu.memory_space<vmem>>, vector<32x4xbf16>,
    %c2_55 = arith.constant 2 : index
    %c2_56 = arith.constant 2 : index
    %c0_57 = arith.constant 0 : index
    %71 = vector.load %arg8[%c2_55, %c2_56, %c0_57] : memref<6x10x4xf32, #tpu.memory_space<vmem>>, vector<4x8x4xf32>
    %72 = vector.shape_cast %71 : vector<4x8x4xf32> to vector<32x4xf32>
    %73 = arith.truncf %72 : vector<32x4xf32> to vector<32x4xbf16>
    %c0_58 = arith.constant 0 : index
    %c32 = arith.constant 32 : index
    %74 = vector.load %arg9[%c0_58, %c32] : memref<32x36xbf16, #tpu.memory_space<vmem>>, vector<32x4xbf16>
    tpu.vector_store %arg9[%c0_58, %c32], %73 {strides = array<i32>} : memref<32x36xbf16, #tpu.memory_space<vmem>>, vector<32x4xbf16>,
    %c0_59 = arith.constant 0 : index
    %c0_60 = arith.constant 0 : index
    %75 = vector.load %arg9[%c0_59, %c0_60] : memref<32x36xbf16, #tpu.memory_space<vmem>>, vector<32x36xbf16>
    %c0_61 = arith.constant 0 : index
    %c0_62 = arith.constant 0 : index
    %76 = vector.load %arg5[%c0_61, %c0_62] : memref<36x8xbf16, #tpu.memory_space<vmem>>, vector<36x8xbf16>
    %cst_63 = arith.constant dense<0.000000e+00> : vector<32x8xf32>
    %77 = tpu.matmul %75, %76, %cst_63 {dimension_numbers = #tpu.dot_dimension_numbers<[1], [0], [0], [1], [0, 0, 1, 1], [], []>} : vector<32x36xbf16>, vector<36x8xbf16>, vector<32x8xf32> -> vector<32x8xf32>
    %c0_64 = arith.constant 0 : index
    %c0_65 = arith.constant 0 : index
    %78 = vector.load %arg6[%c0_64, %c0_65] : memref<1x8xf32, #tpu.memory_space<vmem>>, vector<1x8xf32>
    %79 = vector.broadcast %78 : vector<1x8xf32> to vector<32x8xf32>
    %80 = arith.addf %77, %79 : vector<32x8xf32>
    %cst_66 = arith.constant 0.000000e+00 : f32
    %81 = vector.broadcast %cst_66 : f32 to vector<32x8xf32>
    %82 = arith.maximumf %80, %81 : vector<32x8xf32>
    %c0_67 = arith.constant 0 : index
    %c0_68 = arith.constant 0 : index
    %c0_69 = arith.constant 0 : index
    %83 = vector.load %arg7[%c0_67, %c0_68, %c0_69] : memref<1x32x8xf32, #tpu.memory_space<vmem>>, vector<1x32x8xf32>
    %84 = vector.shape_cast %83 : vector<1x32x8xf32> to vector<32x8xf32>
    %85 = vector.shape_cast %82 : vector<32x8xf32> to vector<1x32x8xf32>
    tpu.vector_store %arg7[%c0_67, %c0_68, %c0_69], %85 {strides = array<i32>} : memref<1x32x8xf32, #tpu.memory_space<vmem>>, vector<1x32x8xf32>,
    return
  }
  func.func @transform_0(%arg0: i32, %arg1: i32) -> (i32, i32, i32, i32, i32) {
    %c0_i32 = arith.constant 0 : i32
    %c0_i32_0 = arith.constant 0 : i32
    %c0_i32_1 = arith.constant 0 : i32
    %c0_i32_2 = arith.constant 0 : i32
    return %arg0, %arg1, %c0_i32, %c0_i32_0, %c0_i32_1 : i32, i32, i32, i32, i32
  }
  func.func @transform_1(%arg0: i32, %arg1: i32) -> (i32, i32, i32, i32, i32) {
    %c4_i32 = arith.constant 4 : i32
    %0 = arith.muli %arg1, %c4_i32 : i32
    %c4_i32_0 = arith.constant 4 : i32
    %1 = arith.addi %0, %c4_i32_0 : i32
    %c0_i32 = arith.constant 0 : i32
    %c0_i32_1 = arith.constant 0 : i32
    %c0_i32_2 = arith.constant 0 : i32
    %c0_i32_3 = arith.constant 0 : i32
    return %arg0, %1, %c0_i32, %c0_i32_1, %c0_i32_2 : i32, i32, i32, i32, i32
  }
  func.func @transform_2(%arg0: i32, %arg1: i32) -> (i32, i32, i32, i32, i32) {
    %c4_i32 = arith.constant 4 : i32
    %0 = arith.muli %arg1, %c4_i32 : i32
    %c4_i32_0 = arith.constant 4 : i32
    %1 = arith.addi %0, %c4_i32_0 : i32
    %c1_i32 = arith.constant 1 : i32
    %2 = arith.addi %1, %c1_i32 : i32
    %c0_i32 = arith.constant 0 : i32
    %c0_i32_1 = arith.constant 0 : i32
    %c0_i32_2 = arith.constant 0 : i32
    %c0_i32_3 = arith.constant 0 : i32
    return %arg0, %2, %c0_i32, %c0_i32_1, %c0_i32_2 : i32, i32, i32, i32, i32
  }
  func.func @transform_3(%arg0: i32, %arg1: i32) -> (i32, i32) {
    %c0_i32 = arith.constant 0 : i32
    %c0_i32_0 = arith.constant 0 : i32
    %c0_i32_1 = arith.constant 0 : i32
    return %c0_i32, %c0_i32_0 : i32, i32
  }
  func.func @transform_4(%arg0: i32, %arg1: i32) -> (i32, i32) {
    %c0_i32 = arith.constant 0 : i32
    %c0_i32_0 = arith.constant 0 : i32
    %c0_i32_1 = arith.constant 0 : i32
    return %c0_i32, %c0_i32_0 : i32, i32
  }
  func.func @transform_5(%arg0: i32, %arg1: i32) -> (i32, i32, i32) {
    %c0_i32 = arith.constant 0 : i32
    %c0_i32_0 = arith.constant 0 : i32
    return %arg0, %arg1, %c0_i32 : i32, i32, i32
  }
}

</mosaic_0001>

<llo_original>
// kernel: down_forward.1
$region0: #{down_forward.1}
  #allocation0 [shape = 'u32[]', space=smem, size = 0x4, offset = 0x4, fixed_abs, tag = 'smem constant byte address 0x4 - core index']
  #allocation1 [shape = 'u32[72,128]{1,0:T(1,128)}', space=vmem, size = 0x9000, scoped, tag = 'internal scratch']
  #allocation2 [shape = 'f32[6,10,4]{2,1,0:T(8,128)}', space=vmem, size = 0xc000, scoped, tag = 'scratch operand']
  #allocation3 [shape = 'bf16[32,36]{1,0:T(8,128)(2,1)}', space=vmem, size = 0x2000, scoped, tag = 'scratch operand']
  %s0 = inlined_call_operand.vmem [shape: f32[2,10,2,10,8], index: 0, kind: input, shape index: {}, may-alias: {0,1,2}]
  %s1 = inlined_call_operand.vmem [shape: f32[2,10,2,10,8], index: 1, kind: input, shape index: {}, may-alias: {0,1,2}]
  %s2 = inlined_call_operand.vmem [shape: f32[2,10,2,10,8], index: 2, kind: input, shape index: {}, may-alias: {0,1,2}]
  %s3 = inlined_call_operand.vmem [shape: bf16[36,8], index: 3, kind: input, shape index: {}]
  %s4 = inlined_call_operand.vmem [shape: f32[1,8], index: 4, kind: input, shape index: {}]
  %s5 = inlined_call_operand.vmem [shape: f32[2,64,8], index: 5, kind: output, shape index: {}]
  %s6 = sld [smem:[#allocation0]]
  $region53: #{down_forward.1} parent=0
    _
  %s8 = ssub.s32 1, %s6
  %s9 = scalar_select 0, %s8, %s6
  loop: start=0, step=1, limit=6
  $region2: #{down_forward.1} parent=0 // loop_pre_header
    _
  $region3: #{down_forward.1} parent=0 // loop_header
    %s11 = sphi 0, %s15
    %p12 = scmp.ge.s32.totalorder %s11, 6
    %s18 = sphi 0, %s30
    %s19 = sphi 0, %s26
    %s20 = sphi 0, %s18
    %s21 = sphi 0, %s19
    %s22 = sphi 0, %s20
    %s23 = sphi 0, %s21
    %s35 = sphi 0, %s37
    %s38 = sphi 0, %s35
    %s39 = sphi 0, %s38
    %s55 = sphi 0, %s39
    %s67 = sphi 0, %s69
    %s70 = sphi 0, %s67
    %s71 = sphi 0, %s70
    %s87 = sphi 0, %s71
    %s99 = sphi 0, %s101
    %s102 = sphi 0, %s99
    %s103 = sphi 0, %s102
    %s119 = sphi 0, %s103
    %s123 = sphi 0, %s123
    %s125 = sphi 0, %s123
    %s126 = sphi 0, %s125
    %s140 = sphi 0, %s126
    %s144 = sphi 0, %s144
    %s146 = sphi 0, %s144
    %s147 = sphi 0, %s146
    %s161 = sphi 0, %s147
    %s169 = sphi 0, %s171
    %s172 = sphi 0, %s169
    %s173 = sphi 0, %s172
    %s189 = sphi 0, %s173
  $region4: #{down_forward.1} parent=0 // loop_header_branch
    %14 = sbr.rel (%p12) target = $region8
  $region5: #{down_forward.1} parent=0 // loop_body
    %s16 = ssub.s32 %s11, 1
    %s17 = ssub.s32 %s11, 2
    %s24 = sadd.s32 1, %s19
    %p25 = scmp.ge.s32.totalorder %s24, 2
    %s26 = scalar_select %p25, 0, %s24
    %s27 = sadd.s32 1, %s18
    %s28 = scalar_select %p25, %s27, %s18
    %p29 = scmp.ge.s32.totalorder %s28, 2
    %s30 = scalar_select %p29, 0, %s28
    %s31 = ssub.s32 %s18, %s30
    %s32 = ssub.s32 %s19, %s26
    %s33 = sor.u32 %s31, %s32
    %p34 = scmp.eq.s32.totalorder %s33, 0
    %s36 = sadd.s32 %s35, 1
    %s37 = scalar_select %p34, %s35, %s36
    %p40 = pneg %p34
    %p41 = scmp.eq.s32.totalorder %s11, 3
    %p42 = por %p40, %p41
    %p43 = scmp.ne.s32.totalorder %s35, %s38
    %p44 = scmp.eq.s32.totalorder %s11, 0
    %p45 = por %p43, %p44
    %p46 = scmp.ne.s32.totalorder %s35, %s38
    %p47 = scmp.eq.s32.totalorder %s16, 3
    %p48 = por %p46, %p47
    %p49 = scmp.ne.s32.totalorder %s38, %s39
    %p50 = scmp.eq.s32.totalorder %s16, 0
    %p51 = por %p49, %p50
    %p52 = scmp.ne.s32.totalorder %s38, %s39
    %p53 = scmp.eq.s32.totalorder %s17, 3
    %p54 = por %p52, %p53
    %p56 = scmp.ne.s32.totalorder %s39, %s55
    %p57 = scmp.eq.s32.totalorder %s17, 0
    %p58 = por %p56, %p57
    %s59 = smul.u32 %s19, 4
    %s60 = sadd.s32 %s59, 4
    %s61 = smul.u32 %s26, 4
    %s62 = sadd.s32 %s61, 4
    %s63 = ssub.s32 %s18, %s30
    %s64 = ssub.s32 %s60, %s62
    %s65 = sor.u32 %s63, %s64
    %p66 = scmp.eq.s32.totalorder %s65, 0
    %s68 = sadd.s32 %s67, 1
    %s69 = scalar_select %p66, %s67, %s68
    %p72 = pneg %p66
    %p73 = scmp.eq.s32.totalorder %s11, 3
    %p74 = por %p72, %p73
    %p75 = scmp.ne.s32.totalorder %s67, %s70
    %p76 = scmp.eq.s32.totalorder %s11, 0
    %p77 = por %p75, %p76
    %p78 = scmp.ne.s32.totalorder %s67, %s70
    %p79 = scmp.eq.s32.totalorder %s16, 3
    %p80 = por %p78, %p79
    %p81 = scmp.ne.s32.totalorder %s70, %s71
    %p82 = scmp.eq.s32.totalorder %s16, 0
    %p83 = por %p81, %p82
    %p84 = scmp.ne.s32.totalorder %s70, %s71
    %p85 = scmp.eq.s32.totalorder %s17, 3
    %p86 = por %p84, %p85
    %p88 = scmp.ne.s32.totalorder %s71, %s87
    %p89 = scmp.eq.s32.totalorder %s17, 0
    %p90 = por %p88, %p89
    %s91 = smul.u32 %s19, 4
    %s92 = sadd.s32 %s91, 5
    %s93 = smul.u32 %s26, 4
    %s94 = sadd.s32 %s93, 5
    %s95 = ssub.s32 %s18, %s30
    %s96 = ssub.s32 %s92, %s94
    %s97 = sor.u32 %s95, %s96
    %p98 = scmp.eq.s32.totalorder %s97, 0
    %s100 = sadd.s32 %s99, 1
    %s101 = scalar_select %p98, %s99, %s100
    %p104 = pneg %p98
    %p105 = scmp.eq.s32.totalorder %s11, 3
    %p106 = por %p104, %p105
    %p107 = scmp.ne.s32.totalorder %s99, %s102
    %p108 = scmp.eq.s32.totalorder %s11, 0
    %p109 = por %p107, %p108
    %p110 = scmp.ne.s32.totalorder %s99, %s102
    %p111 = scmp.eq.s32.totalorder %s16, 3
    %p112 = por %p110, %p111
    %p113 = scmp.ne.s32.totalorder %s102, %s103
    %p114 = scmp.eq.s32.totalorder %s16, 0
    %p115 = por %p113, %p114
    %p116 = scmp.ne.s32.totalorder %s102, %s103
    %p117 = scmp.eq.s32.totalorder %s17, 3
    %p118 = por %p116, %p117
    %p120 = scmp.ne.s32.totalorder %s103, %s119
    %p121 = scmp.eq.s32.totalorder %s17, 0
    %p122 = por %p120, %p121
    %s124 = sadd.s32 %s123, 1
    %p127 = scmp.eq.s32.totalorder %s11, 3
    %p128 = scmp.ne.s32.totalorder %s123, %s125
    %p129 = scmp.eq.s32.totalorder %s11, 0
    %p130 = por %p128, %p129
    %p131 = scmp.ne.s32.totalorder %s123, %s125
    %p132 = scmp.eq.s32.totalorder %s16, 3
    %p133 = por %p131, %p132
    %p134 = scmp.ne.s32.totalorder %s125, %s126
    %p135 = scmp.eq.s32.totalorder %s16, 0
    %p136 = por %p134, %p135
    %p137 = scmp.ne.s32.totalorder %s125, %s126
    %p138 = scmp.eq.s32.totalorder %s17, 3
    %p139 = por %p137, %p138
    %p141 = scmp.ne.s32.totalorder %s126, %s140
    %p142 = scmp.eq.s32.totalorder %s17, 0
    %p143 = por %p141, %p142
    %s145 = sadd.s32 %s144, 1
    %p148 = scmp.eq.s32.totalorder %s11, 3
    %p149 = scmp.ne.s32.totalorder %s144, %s146
    %p150 = scmp.eq.s32.totalorder %s11, 0
    %p151 = por %p149, %p150
    %p152 = scmp.ne.s32.totalorder %s144, %s146
    %p153 = scmp.eq.s32.totalorder %s16, 3
    %p154 = por %p152, %p153
    %p155 = scmp.ne.s32.totalorder %s146, %s147
    %p156 = scmp.eq.s32.totalorder %s16, 0
    %p157 = por %p155, %p156
    %p158 = scmp.ne.s32.totalorder %s146, %s147
    %p159 = scmp.eq.s32.totalorder %s17, 3
    %p160 = por %p158, %p159
    %p162 = scmp.ne.s32.totalorder %s147, %s161
    %p163 = scmp.eq.s32.totalorder %s17, 0
    %p164 = por %p162, %p163
    %s165 = ssub.s32 %s18, %s30
    %s166 = ssub.s32 %s19, %s26
    %s167 = sor.u32 %s165, %s166
    %p168 = scmp.eq.s32.totalorder %s167, 0
    %s170 = sadd.s32 %s169, 1
    %s171 = scalar_select %p168, %s169, %s170
    %p174 = pneg %p168
    %p175 = scmp.eq.s32.totalorder %s11, 3
    %p176 = por %p174, %p175
    %p177 = scmp.ne.s32.totalorder %s169, %s172
    %p178 = scmp.eq.s32.totalorder %s11, 0
    %p179 = por %p177, %p178
    %p180 = scmp.ne.s32.totalorder %s169, %s172
    %p181 = scmp.eq.s32.totalorder %s16, 3
    %p182 = por %p180, %p181
    %p183 = scmp.ne.s32.totalorder %s172, %s173
    %p184 = scmp.eq.s32.totalorder %s16, 0
    %p185 = por %p183, %p184
    %p186 = scmp.ne.s32.totalorder %s172, %s173
    %p187 = scmp.eq.s32.totalorder %s17, 3
    %p188 = por %p186, %p187
    %p190 = scmp.ne.s32.totalorder %s173, %s189
    %p191 = scmp.eq.s32.totalorder %s17, 0
    %p192 = por %p190, %p191
    %p193 = scmp.le.s32.totalorder 1, %s11
    %p194 = scmp.lt.s32.totalorder %s11, 5
    %p195 = pnand %p193, %p194
    %p196 = pneg %p195
    // Predicated region
    $region9: #{down_forward.1} parent=5 // pred_check
      _
    $region10: #{down_forward.1} parent=5 // pred_check_branch
      %198 = sbr.rel (%p195) target = $region12
    $region11: #{down_forward.1} parent=5 // pred_region
      %s199 = ssub.s32 %s11, 1
      // Predicated region
      $region13: #{down_forward.1} parent=11 // pred_check
        %p200 = pneg %p136
      $region14: #{down_forward.1} parent=11 // pred_check_branch
        %202 = sbr.rel (%p200) target = $region16
      $region15: #{down_forward.1} parent=11 // pred_region
        _
      $region16: #{down_forward.1} parent=11 // pred_fallthru
        _
      // Predicated region
      $region17: #{down_forward.1} parent=11 // pred_check
        %p203 = pneg %p157
      $region18: #{down_forward.1} parent=11 // pred_check_branch
        %205 = sbr.rel (%p203) target = $region20
      $region19: #{down_forward.1} parent=11 // pred_region
        _
      $region20: #{down_forward.1} parent=11 // pred_fallthru
        _
    $region12: #{down_forward.1} parent=5 // pred_fallthru
      _
    %p206 = scmp.lt.s32.totalorder %s11, 4
    // Predicated region
    $region21: #{down_forward.1} parent=5 // pred_check
      %p207 = pneg %p206
    $region22: #{down_forward.1} parent=5 // pred_check_branch
      %209 = sbr.rel (%p207) target = $region24
    $region23: #{down_forward.1} parent=5 // pred_region
      // Predicated region
      $region25: #{down_forward.1} parent=23 // pred_check
        %p210 = pneg %p45
      $region26: #{down_forward.1} parent=23 // pred_check_branch
        %212 = sbr.rel (%p210) target = $region28
      $region27: #{down_forward.1} parent=23 // pred_region
        %s213 = smul.u32 4, %s19
        %s214 = ssub.s32 10, %s213
        %p215 = scmp.lt.s32.totalorder %s214, 4
        %s216 = scalar_select %p215, %s214, 4
        %s217 = smul.u32 8, %s216
        %s218 = smul.u32 %s217, 2
        %s219 = smul.u32 %s218, 2
        %p220 = scmp.lt.s32.totalorder %s18, 1
        %s221 = scalar_select %p220, %s18, 1
        %p222 = scmp.lt.s32.totalorder %s213, 9
        %s223 = scalar_select %p222, %s213, 9
        %s224 = smul.addr %s223, 4
        %s225 = smul.addr %s221, 40
        %s226 = sadd.s32 %s224, %s225
        %s227 = smul.addr %s226, 8
        %s228 = scalar_lea.vmem %s0, %s227
        %s229 = smul.u32 4, %s19
        %s230 = ssub.s32 10, %s229
        %p231 = scmp.lt.s32.totalorder %s230, 4
        %s232 = scalar_select %p231, %s230, 4
        %s233 = smul.u32 8, %s232
        %s234 = smul.u32 %s233, 2
        %s235 = smul.u32 %s234, 2
      $region28: #{down_forward.1} parent=23 // pred_fallthru
        _
      // Predicated region
      $region29: #{down_forward.1} parent=23 // pred_check
        %p236 = pneg %p77
      $region30: #{down_forward.1} parent=23 // pred_check_branch
        %238 = sbr.rel (%p236) target = $region32
      $region31: #{down_forward.1} parent=23 // pred_region
        %s239 = smul.u32 %s19, 4
        %s240 = sadd.s32 %s239, 4
        %p241 = scmp.lt.s32.totalorder %s18, 1
        %s242 = scalar_select %p241, %s18, 1
        %p243 = scmp.lt.s32.totalorder %s240, 9
        %s244 = scalar_select %p243, %s240, 9
        %s245 = smul.addr %s244, 4
        %s246 = smul.addr %s242, 40
        %s247 = sadd.s32 %s245, %s246
        %s248 = smul.addr %s247, 8
        %s249 = scalar_lea.vmem %s1, %s248
        %s250 = smul.u32 %s19, 4
        %s251 = sadd.s32 %s250, 4
      $region32: #{down_forward.1} parent=23 // pred_fallthru
        _
      // Predicated region
      $region33: #{down_forward.1} parent=23 // pred_check
        %p252 = pneg %p109
      $region34: #{down_forward.1} parent=23 // pred_check_branch
        %254 = sbr.rel (%p252) target = $region36
      $region35: #{down_forward.1} parent=23 // pred_region
        %s255 = smul.u32 %s19, 4
        %s256 = sadd.s32 %s255, 5
        %p257 = scmp.lt.s32.totalorder %s18, 1
        %s258 = scalar_select %p257, %s18, 1
        %p259 = scmp.lt.s32.totalorder %s256, 9
        %s260 = scalar_select %p259, %s256, 9
        %s261 = smul.addr %s260, 4
        %s262 = smul.addr %s258, 40
        %s263 = sadd.s32 %s261, %s262
        %s264 = smul.addr %s263, 8
        %s265 = scalar_lea.vmem %s2, %s264
        %s266 = smul.u32 %s19, 4
        %s267 = sadd.s32 %s266, 5
      $region36: #{down_forward.1} parent=23 // pred_fallthru
        _
    $region24: #{down_forward.1} parent=5 // pred_fallthru
      _
    %p268 = scmp.le.s32.totalorder 1, %s11
    %p269 = scmp.lt.s32.totalorder %s11, 5
    %p270 = pnand %p268, %p269
    %p271 = pneg %p270
    // Predicated region
    $region37: #{down_forward.1} parent=5 // pred_check
      _
    $region38: #{down_forward.1} parent=5 // pred_check_branch
      %273 = sbr.rel (%p270) target = $region40
    $region39: #{down_forward.1} parent=5 // pred_region
      %s274 = ssub.s32 %s11, 1
      %s275 = smul.u32 4, %s21
      %s276 = ssub.s32 10, %s275
      %p277 = scmp.lt.s32.totalorder %s276, 4
      %s278 = scalar_select %p277, %s276, 4
      %s279 = smul.u32 8, %s278
      %s280 = smul.u32 %s279, 2
      %s281 = smul.u32 %s280, 2
      %p282 = scmp.lt.s32.totalorder %s20, 1
      %s283 = scalar_select %p282, %s20, 1
      %p284 = scmp.lt.s32.totalorder %s275, 9
      %s285 = scalar_select %p284, %s275, 9
      %s286 = smul.addr %s285, 4
      %s287 = smul.addr %s283, 40
      %s288 = sadd.s32 %s286, %s287
      %s289 = smul.addr %s288, 8
      %s290 = scalar_lea.vmem %s0, %s289
      %p291 = pneg %p51
      %p292 = pneg %p48
      %s293 = smul.u32 %s21, 4
      %s294 = sadd.s32 %s293, 4
      %p295 = scmp.lt.s32.totalorder %s20, 1
      %s296 = scalar_select %p295, %s20, 1
      %p297 = scmp.lt.s32.totalorder %s294, 9
      %s298 = scalar_select %p297, %s294, 9
      %s299 = smul.addr %s298, 4
      %s300 = smul.addr %s296, 40
      %s301 = sadd.s32 %s299, %s300
      %s302 = smul.addr %s301, 8
      %s303 = scalar_lea.vmem %s1, %s302
      %p304 = pneg %p83
      %p305 = pneg %p80
      %s306 = smul.u32 %s21, 4
      %s307 = sadd.s32 %s306, 5
      %p308 = scmp.lt.s32.totalorder %s20, 1
      %s309 = scalar_select %p308, %s20, 1
      %p310 = scmp.lt.s32.totalorder %s307, 9
      %s311 = scalar_select %p310, %s307, 9
      %s312 = smul.addr %s311, 4
      %s313 = smul.addr %s309, 40
      %s314 = sadd.s32 %s312, %s313
      %s315 = smul.addr %s314, 8
      %s316 = scalar_lea.vmem %s2, %s315
      %p317 = pneg %p115
      %p318 = pneg %p112
      %p319 = pneg %p136
      %p320 = pneg %p133
      %p321 = pneg %p157
      %p322 = pneg %p154
      %p323 = pneg %p185
      %p324 = pneg %p182
      %s325 = smul.u32 4, %s21
      %p326 = scmp.lt.s32.totalorder %s20, 1
      %s327 = scalar_select %p326, %s20, 1
      %p328 = scmp.lt.s32.totalorder %s325, 7
      %s329 = scalar_select %p328, %s325, 7
      %s330 = smul.addr %s327, 8
      %s331 = sadd.s32 %s329, %s330
      %s332 = smul.addr %s331, 8
      %s333 = scalar_lea.vmem %s5, %s332
      %s334 = smul.u32 4, %s21
      %s335 = ssub.s32 10, %s334
      %p336 = scmp.lt.s32.totalorder %s335, 4
      %s337 = scalar_select %p336, %s335, 4
      %s338 = smul.u32 8, %s337
      %s339 = smul.u32 %s338, 2
      %s340 = smul.u32 %s339, 2
      %p341 = scmp.lt.s32.totalorder %s20, 1
      %s342 = scalar_select %p341, %s20, 1
      %p343 = scmp.lt.s32.totalorder %s334, 9
      %s344 = scalar_select %p343, %s334, 9
      %s345 = smul.addr %s344, 4
      %s346 = smul.addr %s342, 40
      %s347 = sadd.s32 %s345, %s346
      %s348 = smul.addr %s347, 8
      %s349 = scalar_lea.vmem %s0, %s348
      %s350 = smul.u32 4, %s21
      %s351 = ssub.s32 10, %s350
      %p352 = scmp.lt.s32.totalorder %s351, 4
      %s353 = scalar_select %p352, %s351, 4
      %s354 = smul.u32 8, %s353
      %s355 = smul.u32 %s354, 2
      %s356 = smul.u32 %s355, 2
      %s357 = smul.u32 %s21, 4
      %s358 = sadd.s32 %s357, 4
      %p359 = scmp.lt.s32.totalorder %s20, 1
      %s360 = scalar_select %p359, %s20, 1
      %p361 = scmp.lt.s32.totalorder %s358, 9
      %s362 = scalar_select %p361, %s358, 9
      %s363 = smul.addr %s362, 4
      %s364 = smul.addr %s360, 40
      %s365 = sadd.s32 %s363, %s364
      %s366 = smul.addr %s365, 8
      %s367 = scalar_lea.vmem %s1, %s366
      %s368 = smul.u32 %s21, 4
      %s369 = sadd.s32 %s368, 4
      %s370 = smul.u32 %s21, 4
      %s371 = sadd.s32 %s370, 5
      %p372 = scmp.lt.s32.totalorder %s20, 1
      %s373 = scalar_select %p372, %s20, 1
      %p374 = scmp.lt.s32.totalorder %s371, 9
      %s375 = scalar_select %p374, %s371, 9
      %s376 = smul.addr %s375, 4
      %s377 = smul.addr %s373, 40
      %s378 = sadd.s32 %s376, %s377
      %s379 = smul.addr %s378, 8
      %s380 = scalar_lea.vmem %s2, %s379
      %s381 = smul.u32 %s21, 4
      %s382 = sadd.s32 %s381, 5
      %s383 = smul.u32 4, %s21
      %p384 = scmp.lt.s32.totalorder %s20, 1
      %s385 = scalar_select %p384, %s20, 1
      %p386 = scmp.lt.s32.totalorder %s383, 7
      %s387 = scalar_select %p386, %s383, 7
      %s388 = smul.addr %s385, 8
      %s389 = sadd.s32 %s387, %s388
      %s390 = smul.addr %s389, 8
      %s391 = scalar_lea.vmem %s5, %s390
      %s392 = smul.u32 4, %s21
      %v394 = vld [vmem:[%s349] sm:$0xff]
      %v395 = vld [vmem:[%s349 + $0x8] sm:$0x3]
      %v396 = vld [vmem:[%s349 + $0x10] sm:$0xff]
      %v397 = vld [vmem:[%s349 + $0x18] sm:$0x3]
      %v398 = vld [vmem:[%s349 + $0x20] sm:$0xff]
      %v399 = vld [vmem:[%s349 + $0x28] sm:$0x3]
      %v400 = vld [vmem:[%s349 + $0x30] sm:$0xff]
      %v401 = vld [vmem:[%s349 + $0x38] sm:$0x3]
      %v402 = vld [vmem:[%s349 + $0x40] sm:$0xff]
      %v403 = vld [vmem:[%s349 + $0x48] sm:$0x3]
      %v404 = vld [vmem:[%s349 + $0x50] sm:$0xff]
      %v405 = vld [vmem:[%s349 + $0x58] sm:$0x3]
      %v406 = vld [vmem:[%s349 + $0x60] sm:$0xff]
      %v407 = vld [vmem:[%s349 + $0x68] sm:$0x3]
      %v408 = vld [vmem:[%s349 + $0x70] sm:$0xff]
      %v409 = vld [vmem:[%s349 + $0x78] sm:$0x3]
      %v410 = vadd.f32 %v394, %v396
      %v411 = vadd.f32 %v395, %v397
      %v412 = vadd.f32 %v398, %v400
      %v413 = vadd.f32 %v399, %v401
      %v414 = vadd.f32 %v402, %v404
      %v415 = vadd.f32 %v403, %v405
      %v416 = vadd.f32 %v406, %v408
      %v417 = vadd.f32 %v407, %v409
      %426 = vrot.lane.b32.xlu0 %v410, 124
      %v427 = vpop.permute.xlu0 %426
      %428 = vrot.lane.b32.xlu0 %v411, 124
      %v429 = vpop.permute.xlu0 %428
      %430 = vrot.lane.b32.xlu0 %v412, 124
      %v431 = vpop.permute.xlu0 %430
      %432 = vrot.lane.b32.xlu0 %v413, 124
      %v433 = vpop.permute.xlu0 %432
      %434 = vrot.lane.b32.xlu0 %v414, 124
      %v435 = vpop.permute.xlu0 %434
      %436 = vrot.lane.b32.xlu0 %v415, 124
      %v437 = vpop.permute.xlu0 %436
      %438 = vrot.lane.b32.xlu0 %v416, 124
      %v439 = vpop.permute.xlu0 %438
      %440 = vrot.lane.b32.xlu0 %v417, 124
      %v441 = vpop.permute.xlu0 %440
      %v450 = vadd.f32 %v410, %v427
      %v451 = vadd.f32 %v411, %v429
      %v452 = vadd.f32 %v412, %v431
      %v453 = vadd.f32 %v413, %v433
      %v454 = vadd.f32 %v414, %v435
      %v455 = vadd.f32 %v415, %v437
      %v456 = vadd.f32 %v416, %v439
      %v457 = vadd.f32 %v417, %v441
      %v458 = vmul.f32 %v450, 0.25
      %v459 = vmul.f32 %v451, 0.25
      %v460 = vmul.f32 %v452, 0.25
      %v461 = vmul.f32 %v453, 0.25
      %v462 = vmul.f32 %v454, 0.25
      %v463 = vmul.f32 %v455, 0.25
      %v464 = vmul.f32 %v456, 0.25
      %v465 = vmul.f32 %v457, 0.25
      %vm466 = vcmask 31744
      %467 = vst.msk [vmem:[#allocation2] sm:$0xff] %vm466, %v458
      %vm468 = vcmask 25600
      %469 = vst.msk [vmem:[#allocation2 + $0x8] sm:$0x3] %vm468, %v459
      %470 = vst.msk [vmem:[#allocation2 + $0x10] sm:$0xff] %vm466, %v460
      %471 = vst.msk [vmem:[#allocation2 + $0x18] sm:$0x3] %vm468, %v461
      %472 = vst.msk [vmem:[#allocation2 + $0x20] sm:$0xff] %vm466, %v462
      %473 = vst.msk [vmem:[#allocation2 + $0x28] sm:$0x3] %vm468, %v463
      %474 = vst.msk [vmem:[#allocation2 + $0x30] sm:$0xff] %vm466, %v464
      %475 = vst.msk [vmem:[#allocation2 + $0x38] sm:$0x3] %vm468, %v465
      %v476 = vld [vmem:[%s367] sm:$0xff]
      %v477 = vld [vmem:[%s367 + $0x8] sm:$0x3]
      %v478 = vld [vmem:[%s367 + $0x10] sm:$0xff]
      %v479 = vld [vmem:[%s367 + $0x18] sm:$0x3]
      %v480 = vadd.f32 %v476, %v478
      %v481 = vadd.f32 %v477, %v479
      %484 = vrot.lane.b32.xlu0 %v480, 124
      %v485 = vpop.permute.xlu0 %484
      %486 = vrot.lane.b32.xlu0 %v481, 124
      %v487 = vpop.permute.xlu0 %486
      %v490 = vadd.f32 %v480, %v485
      %v491 = vadd.f32 %v481, %v487
      %v492 = vmul.f32 %v490, 0.25
      %v493 = vmul.f32 %v491, 0.25
      %s494 = scalar_lea.vmem [#allocation2], 64
      %495 = vst.msk [vmem:[%s494] sm:$0xff] %vm466, %v492
      %496 = vst.msk [vmem:[%s494 + $0x8] sm:$0x3] %vm468, %v493
      %v497 = vld [vmem:[%s380] sm:$0xff]
      %v498 = vld [vmem:[%s380 + $0x8] sm:$0x3]
      %v499 = vld [vmem:[%s380 + $0x10] sm:$0xff]
      %v500 = vld [vmem:[%s380 + $0x18] sm:$0x3]
      %v501 = vadd.f32 %v497, %v499
      %v502 = vadd.f32 %v498, %v500
      %505 = vrot.lane.b32.xlu0 %v501, 124
      %v506 = vpop.permute.xlu0 %505
      %507 = vrot.lane.b32.xlu0 %v502, 124
      %v508 = vpop.permute.xlu0 %507
      %v511 = vadd.f32 %v501, %v506
      %v512 = vadd.f32 %v502, %v508
      %v513 = vmul.f32 %v511, 0.25
      %v514 = vmul.f32 %v512, 0.25
      %s515 = scalar_lea.vmem [#allocation2], 80
      %516 = vst.msk [vmem:[%s515] sm:$0xff] %vm466, %v513
      %517 = vst.msk [vmem:[%s515 + $0x8] sm:$0x3] %vm468, %v514
      %v518 = vld [vmem:[#allocation2] sm:$0xff]
      %v519 = vld [vmem:[#allocation2 + $0x10] sm:$0xff]
      %v520 = vld [vmem:[#allocation2 + $0x20] sm:$0xff]
      %v521 = vld [vmem:[#allocation2 + $0x30] sm:$0xff]
      %v522 = vpack.c.bf16 %v518, %v518
      %v523 = vpack.c.bf16 %v519, %v519
      %v524 = vpack.c.bf16 %v520, %v520
      %v525 = vpack.c.bf16 %v521, %v521
      %vm526 = vcmask 27648
      %527 = vst.msk [vmem:[#allocation3] sm:$0xf] %vm526, %v522
      %528 = vst.msk [vmem:[#allocation3 + $0x4] sm:$0xf] %vm526, %v523
      %529 = vst.msk [vmem:[#allocation3 + $0x8] sm:$0xf] %vm526, %v524
      %530 = vst.msk [vmem:[#allocation3 + $0xc] sm:$0xf] %vm526, %v525
      %v531 = vld [vmem:[#allocation2 + $0x1] sm:$0xff]
      %v532 = vld [vmem:[#allocation2 + $0x11] sm:$0xff]
      %v533 = vld [vmem:[#allocation2 + $0x21] sm:$0xff]
      %v534 = vld [vmem:[#allocation2 + $0x31] sm:$0xff]
      %v535 = vpack.c.bf16 %v531, %v531
      %v536 = vpack.c.bf16 %v532, %v532
      %v537 = vpack.c.bf16 %v533, %v533
      %v538 = vpack.c.bf16 %v534, %v534
      %543 = vrot.lane.b32.xlu0 %v535, 4
      %v544 = vpop.permute.xlu0 %543
      %545 = vrot.lane.b32.xlu0 %v536, 4
      %v546 = vpop.permute.xlu0 %545
      %547 = vrot.lane.b32.xlu0 %v537, 4
      %v548 = vpop.permute.xlu0 %547
      %549 = vrot.lane.b32.xlu0 %v538, 4
      %v550 = vpop.permute.xlu0 %549
      %vm555 = vcmask 60448
      %556 = vst.msk [vmem:[#allocation3] sm:$0xf] %vm555, %v544
      %557 = vst.msk [vmem:[#allocation3 + $0x4] sm:$0xf] %vm555, %v546
      %558 = vst.msk [vmem:[#allocation3 + $0x8] sm:$0xf] %vm555, %v548
      %559 = vst.msk [vmem:[#allocation3 + $0xc] sm:$0xf] %vm555, %v550
      %v560 = vld [vmem:[#allocation2 + $0x2] sm:$0xff]
      %v561 = vld [vmem:[#allocation2 + $0x12] sm:$0xff]
      %v562 = vld [vmem:[#allocation2 + $0x22] sm:$0xff]
      %v563 = vld [vmem:[#allocation2 + $0x32] sm:$0xff]
      %v564 = vpack.c.bf16 %v560, %v560
      %v565 = vpack.c.bf16 %v561, %v561
      %v566 = vpack.c.bf16 %v562, %v562
      %v567 = vpack.c.bf16 %v563, %v563
      %572 = vrot.lane.b32.xlu0 %v564, 8
      %v573 = vpop.permute.xlu0 %572
      %574 = vrot.lane.b32.xlu0 %v565, 8
      %v575 = vpop.permute.xlu0 %574
      %576 = vrot.lane.b32.xlu0 %v566, 8
      %v577 = vpop.permute.xlu0 %576
      %578 = vrot.lane.b32.xlu0 %v567, 8
      %v579 = vpop.permute.xlu0 %578
      %vm584 = vcmask 93248
      %585 = vst.msk [vmem:[#allocation3] sm:$0xf] %vm584, %v573
      %586 = vst.msk [vmem:[#allocation3 + $0x4] sm:$0xf] %vm584, %v575
      %587 = vst.msk [vmem:[#allocation3 + $0x8] sm:$0xf] %vm584, %v577
      %588 = vst.msk [vmem:[#allocation3 + $0xc] sm:$0xf] %vm584, %v579
      %s589 = scalar_lea.vmem [#allocation2], 16
      %v590 = vld [vmem:[%s589] sm:$0xff]
      %v591 = vld [vmem:[%s589 + $0x10] sm:$0xff]
      %v592 = vld [vmem:[%s589 + $0x20] sm:$0xff]
      %v593 = vld [vmem:[%s589 + $0x30] sm:$0xff]
      %v594 = vpack.c.bf16 %v590, %v590
      %v595 = vpack.c.bf16 %v591, %v591
      %v596 = vpack.c.bf16 %v592, %v592
      %v597 = vpack.c.bf16 %v593, %v593
      %602 = vrot.lane.b32.xlu0 %v594, 12
      %v603 = vpop.permute.xlu0 %602
      %604 = vrot.lane.b32.xlu0 %v595, 12
      %v605 = vpop.permute.xlu0 %604
      %606 = vrot.lane.b32.xlu0 %v596, 12
      %v607 = vpop.permute.xlu0 %606
      %608 = vrot.lane.b32.xlu0 %v597, 12
      %v609 = vpop.permute.xlu0 %608
      %vm614 = vcmask 126048
      %615 = vst.msk [vmem:[#allocation3] sm:$0xf] %vm614, %v603
      %616 = vst.msk [vmem:[#allocation3 + $0x4] sm:$0xf] %vm614, %v605
      %617 = vst.msk [vmem:[#allocation3 + $0x8] sm:$0xf] %vm614, %v607
      %618 = vst.msk [vmem:[#allocation3 + $0xc] sm:$0xf] %vm614, %v609
      %v619 = vld [vmem:[%s589 + $0x1] sm:$0xff]
      %v620 = vld [vmem:[%s589 + $0x11] sm:$0xff]
      %v621 = vld [vmem:[%s589 + $0x21] sm:$0xff]
      %v622 = vld [vmem:[%s589 + $0x31] sm:$0xff]
      %v623 = vpack.c.bf16 %v619, %v619
      %v624 = vpack.c.bf16 %v620, %v620
      %v625 = vpack.c.bf16 %v621, %v621
      %v626 = vpack.c.bf16 %v622, %v622
      %631 = vrot.lane.b32.xlu0 %v623, 16
      %v632 = vpop.permute.xlu0 %631
      %633 = vrot.lane.b32.xlu0 %v624, 16
      %v634 = vpop.permute.xlu0 %633
      %635 = vrot.lane.b32.xlu0 %v625, 16
      %v636 = vpop.permute.xlu0 %635
      %637 = vrot.lane.b32.xlu0 %v626, 16
      %v638 = vpop.permute.xlu0 %637
      %vm643 = vcmask 158848
      %644 = vst.msk [vmem:[#allocation3] sm:$0xf] %vm643, %v632
      %645 = vst.msk [vmem:[#allocation3 + $0x4] sm:$0xf] %vm643, %v634
      %646 = vst.msk [vmem:[#allocation3 + $0x8] sm:$0xf] %vm643, %v636
      %647 = vst.msk [vmem:[#allocation3 + $0xc] sm:$0xf] %vm643, %v638
      %v648 = vld [vmem:[%s589 + $0x2] sm:$0xff]
      %v649 = vld [vmem:[%s589 + $0x12] sm:$0xff]
      %v650 = vld [vmem:[%s589 + $0x22] sm:$0xff]
      %v651 = vld [vmem:[%s589 + $0x32] sm:$0xff]
      %v652 = vpack.c.bf16 %v648, %v648
      %v653 = vpack.c.bf16 %v649, %v649
      %v654 = vpack.c.bf16 %v650, %v650
      %v655 = vpack.c.bf16 %v651, %v651
      %660 = vrot.lane.b32.xlu0 %v652, 20
      %v661 = vpop.permute.xlu0 %660
      %662 = vrot.lane.b32.xlu0 %v653, 20
      %v663 = vpop.permute.xlu0 %662
      %664 = vrot.lane.b32.xlu0 %v654, 20
      %v665 = vpop.permute.xlu0 %664
      %666 = vrot.lane.b32.xlu0 %v655, 20
      %v667 = vpop.permute.xlu0 %666
      %vm672 = vcmask 191648
      %673 = vst.msk [vmem:[#allocation3] sm:$0xf] %vm672, %v661
      %674 = vst.msk [vmem:[#allocation3 + $0x4] sm:$0xf] %vm672, %v663
      %675 = vst.msk [vmem:[#allocation3 + $0x8] sm:$0xf] %vm672, %v665
      %676 = vst.msk [vmem:[#allocation3 + $0xc] sm:$0xf] %vm672, %v667
      %s677 = scalar_lea.vmem [#allocation2], 32
      %v678 = vld [vmem:[%s677] sm:$0xff]
      %v679 = vld [vmem:[%s677 + $0x10] sm:$0xff]
      %v680 = vld [vmem:[%s677 + $0x20] sm:$0xff]
      %v681 = vld [vmem:[%s677 + $0x30] sm:$0xff]
      %v682 = vpack.c.bf16 %v678, %v678
      %v683 = vpack.c.bf16 %v679, %v679
      %v684 = vpack.c.bf16 %v680, %v680
      %v685 = vpack.c.bf16 %v681, %v681
      %690 = vrot.lane.b32.xlu0 %v682, 24
      %v691 = vpop.permute.xlu0 %690
      %692 = vrot.lane.b32.xlu0 %v683, 24
      %v693 = vpop.permute.xlu0 %692
      %694 = vrot.lane.b32.xlu0 %v684, 24
      %v695 = vpop.permute.xlu0 %694
      %696 = vrot.lane.b32.xlu0 %v685, 24
      %v697 = vpop.permute.xlu0 %696
      %vm702 = vcmask 224448
      %703 = vst.msk [vmem:[#allocation3] sm:$0xf] %vm702, %v691
      %704 = vst.msk [vmem:[#allocation3 + $0x4] sm:$0xf] %vm702, %v693
      %705 = vst.msk [vmem:[#allocation3 + $0x8] sm:$0xf] %vm702, %v695
      %706 = vst.msk [vmem:[#allocation3 + $0xc] sm:$0xf] %vm702, %v697
      %v707 = vld [vmem:[%s677 + $0x1] sm:$0xff]
      %v708 = vld [vmem:[%s677 + $0x11] sm:$0xff]
      %v709 = vld [vmem:[%s677 + $0x21] sm:$0xff]
      %v710 = vld [vmem:[%s677 + $0x31] sm:$0xff]
      %v711 = vpack.c.bf16 %v707, %v707
      %v712 = vpack.c.bf16 %v708, %v708
      %v713 = vpack.c.bf16 %v709, %v709
      %v714 = vpack.c.bf16 %v710, %v710
      %719 = vrot.lane.b32.xlu0 %v711, 28
      %v720 = vpop.permute.xlu0 %719
      %721 = vrot.lane.b32.xlu0 %v712, 28
      %v722 = vpop.permute.xlu0 %721
      %723 = vrot.lane.b32.xlu0 %v713, 28
      %v724 = vpop.permute.xlu0 %723
      %725 = vrot.lane.b32.xlu0 %v714, 28
      %v726 = vpop.permute.xlu0 %725
      %vm731 = vcmask 257248
      %732 = vst.msk [vmem:[#allocation3] sm:$0xf] %vm731, %v720
      %733 = vst.msk [vmem:[#allocation3 + $0x4] sm:$0xf] %vm731, %v722
      %734 = vst.msk [vmem:[#allocation3 + $0x8] sm:$0xf] %vm731, %v724
      %735 = vst.msk [vmem:[#allocation3 + $0xc] sm:$0xf] %vm731, %v726
      %v736 = vld [vmem:[%s677 + $0x2] sm:$0xff]
      %v737 = vld [vmem:[%s677 + $0x12] sm:$0xff]
      %v738 = vld [vmem:[%s677 + $0x22] sm:$0xff]
      %v739 = vld [vmem:[%s677 + $0x32] sm:$0xff]
      %v740 = vpack.c.bf16 %v736, %v736
      %v741 = vpack.c.bf16 %v737, %v737
      %v742 = vpack.c.bf16 %v738, %v738
      %v743 = vpack.c.bf16 %v739, %v739
      %748 = vrot.lane.b32.xlu0 %v740, 32
      %v749 = vpop.permute.xlu0 %748
      %750 = vrot.lane.b32.xlu0 %v741, 32
      %v751 = vpop.permute.xlu0 %750
      %752 = vrot.lane.b32.xlu0 %v742, 32
      %v753 = vpop.permute.xlu0 %752
      %754 = vrot.lane.b32.xlu0 %v743, 32
      %v755 = vpop.permute.xlu0 %754
      %vm760 = vcmask 290048
      %761 = vst.msk [vmem:[#allocation3] sm:$0xf] %vm760, %v749
      %762 = vst.msk [vmem:[#allocation3 + $0x4] sm:$0xf] %vm760, %v751
      %763 = vst.msk [vmem:[#allocation3 + $0x8] sm:$0xf] %vm760, %v753
      %764 = vst.msk [vmem:[#allocation3 + $0xc] sm:$0xf] %vm760, %v755
      %v765 = vld [vmem:[#allocation3] sm:$0xf]
      %v766 = vld [vmem:[#allocation3 + $0x4] sm:$0xf]
      %v767 = vld [vmem:[#allocation3 + $0x8] sm:$0xf]
      %v768 = vld [vmem:[#allocation3 + $0xc] sm:$0xf]
      %v769 = vld [vmem:[%s3] sm:$0xf]
      %v770 = vld [vmem:[%s3 + $0x4] sm:$0xf]
      %v771 = vld [vmem:[%s3 + $0x8] sm:$0xf]
      %v772 = vld [vmem:[%s3 + $0xc] sm:$0xf]
      %v773 = vld [vmem:[%s3 + $0x10] sm:$0x3]
      %v774 = vld [vmem:[%s4] sm:$0x1]
      %v776 = vperm.slane %v774, 0
      %v782 = vunpack.c.l.b16 %v765
      %v783 = vunpack.c.l.b16 %v766
      %v784 = vunpack.c.l.b16 %v767
      %v785 = vunpack.c.l.b16 %v768
      %v786 = vpack.c.b16 %v783, %v782
      %v787 = vpack.c.b16 %v785, %v784
      %v793 = vunpack.c.l.b16 %v769
      %v794 = vunpack.c.l.b16 %v770
      %v795 = vunpack.c.l.b16 %v771
      %v796 = vunpack.c.l.b16 %v772
      %v797 = vunpack.c.l.b16 %v773
      %v798 = vpack.c.b16 %v794, %v793
      %v799 = vpack.c.b16 %v796, %v795
      %v800 = vpack.c.b16 %v797, %v797
      %vm803 = vcmask 293888
      %v805 = vsel %vm803, %v786, 0
      %v808 = vsel %vm803, %v787, 0
      %vm810 = vcmask 1041408
      %v812 = vsel %vm810, %v800, 0
      %814 = vmatpush.bf16.msra.mxu0 0
      %815 = vmatpush.bf16.msra.mxu0 0
      %816 = vmatpush.bf16.msra.mxu0 0
      %817 = vmatpush.bf16.msra.mxu0 0
      %818 = vmatpush.bf16.msra.mxu0 0
      %819 = vmatpush.bf16.msra.mxu0 %v812
      %820 = vmatpush.bf16.msra.mxu0 %v799
      %821 = vmatpush.bf16.msra.mxu0 %v798
      %822 = vmatmul.bf16.gmra.mxu0 %v805
      %v823 = vpop.f32.mrf.mxu0
      %v824 = vadd.f32 %v776, %v823
      %v825 = vpop.f32.mrf.mxu0
      %v826 = vadd.f32 %v776, %v825
      %827 = vmatmul.bf16.gmra.mxu0 %v808
      %v828 = vpop.f32.mrf.mxu0
      %v829 = vadd.f32 %v776, %v828
      %v830 = vpop.f32.mrf.mxu0
      %v831 = vadd.f32 %v776, %v830
      %832 = vdwg.mxu0
      %v833 = vmax.f32 %v824, 0.0
      %v834 = vmax.f32 %v826, 0.0
      %v835 = vmax.f32 %v829, 0.0
      %v836 = vmax.f32 %v831, 0.0
      %vm837 = vcmask 64512
      %838 = vst.msk [vmem:[%s391] sm:$0xff] %vm837, %v833
      %839 = vst.msk [vmem:[%s391 + $0x8] sm:$0xff] %vm837, %v834
      %840 = vst.msk [vmem:[%s391 + $0x10] sm:$0xff] %vm837, %v835
      %841 = vst.msk [vmem:[%s391 + $0x18] sm:$0xff] %vm837, %v836
      %s842 = smul.u32 4, %s21
      %p843 = scmp.lt.s32.totalorder %s20, 1
      %s844 = scalar_select %p843, %s20, 1
      %p845 = scmp.lt.s32.totalorder %s842, 7
      %s846 = scalar_select %p845, %s842, 7
      %s847 = smul.addr %s844, 8
      %s848 = sadd.s32 %s846, %s847
      %s849 = smul.addr %s848, 8
      %s850 = scalar_lea.vmem %s5, %s849
      // Predicated region
      $region41: #{down_forward.1} parent=39 // pred_check
        %p851 = pneg %p182
      $region42: #{down_forward.1} parent=39 // pred_check_branch
        %853 = sbr.rel (%p851) target = $region44
      $region43: #{down_forward.1} parent=39 // pred_region
        %s854 = smul.u32 4, %s21
      $region44: #{down_forward.1} parent=39 // pred_fallthru
        _
    $region40: #{down_forward.1} parent=5 // pred_fallthru
      _
    %p855 = scmp.le.s32.totalorder 2, %s11
    // Predicated region
    $region45: #{down_forward.1} parent=5 // pred_check
      %p856 = pneg %p855
    $region46: #{down_forward.1} parent=5 // pred_check_branch
      %858 = sbr.rel (%p856) target = $region48
    $region47: #{down_forward.1} parent=5 // pred_region
      %s859 = ssub.s32 %s11, 2
      // Predicated region
      $region49: #{down_forward.1} parent=47 // pred_check
        %p860 = pneg %p188
      $region50: #{down_forward.1} parent=47 // pred_check_branch
        %862 = sbr.rel (%p860) target = $region52
      $region51: #{down_forward.1} parent=47 // pred_region
        %s863 = smul.u32 4, %s23
        %p864 = scmp.lt.s32.totalorder %s22, 1
        %s865 = scalar_select %p864, %s22, 1
        %p866 = scmp.lt.s32.totalorder %s863, 7
        %s867 = scalar_select %p866, %s863, 7
        %s868 = smul.addr %s865, 8
        %s869 = sadd.s32 %s867, %s868
        %s870 = smul.addr %s869, 8
        %s871 = scalar_lea.vmem %s5, %s870
      $region52: #{down_forward.1} parent=47 // pred_fallthru
        _
    $region48: #{down_forward.1} parent=5 // pred_fallthru
      _
  $region6: #{down_forward.1} parent=0 // loop_footer
    %s15 = sadd.s32 1, %s11
  $region7: #{down_forward.1} parent=0 // loop_footer_branch
    %10 = sbr.rel target = $region3
  $region8: #{down_forward.1} parent=0 // loop_exit
    _

</llo_original>
